<compile_context>
chip_gen: v7x
topology: tpu7x:2x2x1
jax: 0.10.0
libtpu: 0.0.40
codegen_flags: <defaults>
</compile_context>

<pallas_src>
import math
from functools import partial

import jax
import jax.numpy as jnp
from jax.experimental import pallas as pl
from jax.experimental.pallas import tpu as pltpu


# ----------------------------------------------------------------------------- helpers
def _round_up(a: int, m: int) -> int:
    return ((a + m - 1) // m) * m


def _vmem_capacity_bytes() -> int:
    """Physical VMEM per core; fall back to the smallest (v7x: 64 MiB)."""
    try:
        info = pltpu.get_tpu_info()
        cap = getattr(info, "vmem_capacity_bytes", None)
        if cap:
            return int(cap)
    except Exception:
        pass
    return 64 << 20


# ----------------------------------------------------------------------------- kernels
def _onehot_kernel(ids_ref, table_ref, out_ref, *, scale):
    """Resident table + one-hot matmul gather (small vocab).

    ids_ref:   (tb, 1)  int32 block in VMEM
    table_ref: (vocab, d_model) resident in VMEM (same block every grid step)
    out_ref:   (tb, d_model)
    """
    ids = ids_ref[...]                                  # (tb, 1) int32
    tb = ids.shape[0]
    vocab = table_ref.shape[0]
    iota = jax.lax.broadcasted_iota(jnp.int32, (tb, vocab), 1)
    onehot = (ids == iota).astype(table_ref.dtype)      # (tb, vocab)
    # HIGHEST precision keeps the f32 one-hot matmul an exact row copy.
    acc = jnp.dot(onehot, table_ref[...],
                  preferred_element_type=jnp.float32,
                  precision=jax.lax.Precision.HIGHEST)
    out_ref[...] = (acc * scale).astype(out_ref.dtype)


def _resident_gather_kernel(ids_ref, table_ref, out_ref, *, tb, scale):
    """Resident table + per-row dynamic-slice gather (medium tables).

    ids_ref:   flat int32 ids in SMEM (scalar prefetch)
    table_ref: (vocab, d_model) resident in VMEM
    out_ref:   (tb, d_model)
    """
    base = pl.program_id(0) * tb
    for t in range(tb):
        row = ids_ref[base + t]                          # SMEM scalar read
        out_ref[pl.ds(t, 1), :] = table_ref[pl.ds(row, 1), :] * scale


def _hbm_gather_kernel(ids_ref, table_hbm, out_ref, rows, sems, *,
                       tb, scale, n_blocks):
    """HBM row gather with manual cross-step double buffering.

    ids_ref:   flat int32 ids in SMEM (scalar prefetch)
    table_hbm: (vocab, d_model) left in HBM (memory_space=pl.ANY)
    rows:      VMEM scratch (2, tb, d_model) - double buffer
    sems:      DMA semaphores (2,) - ONE shared semaphore per buffer slot
    """
    b = pl.program_id(0)

    def issue(block, slot):
        base = block * tb
        for t in range(tb):
            row = ids_ref[base + t]
            pltpu.make_async_copy(
                table_hbm.at[pl.ds(row, 1), :],          # (1, d_model) row in HBM
                rows.at[slot, pl.ds(t, 1), :],           # slot in VMEM scratch
                sems.at[slot],                           # shared per-slot semaphore
            ).start()

    # Prime the pipeline with block 0, then prefetch block b+1 while block b is
    # consumed (grid axis is sequential / "arbitrary", so this is well-defined).
    @pl.when(b == 0)
    def _():
        issue(0, 0)

    @pl.when(b + 1 < n_blocks)
    def _():
        issue(b + 1, (b + 1) & 1)

    slot = b & 1
    # Aggregated wait: one wait for the full (tb, d_model) slot == sum of the
    # tb row copies signalled on the shared semaphore.
    pltpu.make_async_copy(rows.at[slot], rows.at[slot], sems.at[slot]).wait()
    out_ref[...] = rows[slot] * scale


# ----------------------------------------------------------------------------- wrapper
def embeddings(x: jnp.ndarray, weight: jnp.ndarray, *, force_path: str | None = None):
    """Pallas implementation of Embeddings.forward: weight[x] * sqrt(d_model)."""
    vocab, d_model = weight.shape
    scale = math.sqrt(d_model)
    itemsize = weight.dtype.itemsize
    table_bytes = vocab * d_model * itemsize

    orig_shape = x.shape
    # Clamp ids: row ids drive addresses/DMA sources; never let them go OOB.
    ids = jnp.clip(x.reshape(-1).astype(jnp.int32), 0, vocab - 1)
    n = ids.shape[0]

    # Per-generation VMEM budget (v7x: 64 MiB physical -> ~48 MiB usable;
    # v5e/v6e: 128 MiB -> ~96 MiB usable once vmem_limit_bytes is raised).
    vmem_cap = _vmem_capacity_bytes()
    budget = (vmem_cap * 3) // 4
    # Conservative: assume the resident table may be double-buffered by the
    # pipeline, plus headroom for output tiles / one-hot intermediates.
    resident_need = 2 * table_bytes + (6 << 20)

    path = force_path
    if path is None:
        if vocab <= 2048 and resident_need <= budget:
            path = "onehot"
        elif resident_need <= budget:
            path = "resident"
        else:
            path = "hbm"

    # Token block size per grid step (always a multiple of 8 for the sublane rule).
    if path == "onehot":
        tb_cap = 128                                   # good MXU M-tile
    elif path == "resident":
        tb_cap = 64
    else:  # hbm: target ~128 KiB of gathered rows per block, bounded unroll
        tb_cap = max(8, min(128, _round_up((128 * 1024) // max(1, d_model * itemsize), 8)))
    tb = max(8, min(tb_cap, _round_up(n, 8)))
    n_pad = _round_up(n, tb)
    if n_pad != n:
        ids = jnp.pad(ids, (0, n_pad - n))             # padded rows gather row 0
    n_blocks = n_pad // tb

    out_tile_bytes = tb * d_model * itemsize
    if path == "onehot":
        working = 2 * table_bytes + 2 * out_tile_bytes + 2 * tb * max(vocab, 128) * 4
    elif path == "resident":
        working = 2 * table_bytes + 2 * out_tile_bytes
    else:
        working = 4 * out_tile_bytes                   # rows double buffer + out tiles
    vmem_limit = int(min(max(working + (4 << 20), 32 << 20), budget))

    out_shape = jax.ShapeDtypeStruct((n_pad, d_model), weight.dtype)

    if path == "onehot":
        ids2 = ids.reshape(-1, 1)                      # (n_pad, 1): last dim == full dim
        out = pl.pallas_call(
            partial(_onehot_kernel, scale=scale),
            out_shape=out_shape,
            grid_spec=pltpu.PrefetchScalarGridSpec(
                num_scalar_prefetch=0,
                grid=(n_blocks,),
                in_specs=[
                    pl.BlockSpec((tb, 1), lambda b: (b, 0)),
                    # Constant block index -> table stays resident in VMEM.
                    pl.BlockSpec((vocab, d_model), lambda b: (0, 0)),
                ],
                out_specs=pl.BlockSpec((tb, d_model), lambda b: (b, 0)),
            ),
            compiler_params=pltpu.CompilerParams(
                dimension_semantics=("parallel",),
                vmem_limit_bytes=vmem_limit),
        )(ids2, weight)

    elif path == "resident":
        out = pl.pallas_call(
            partial(_resident_gather_kernel, tb=tb, scale=scale),
            out_shape=out_shape,
            grid_spec=pltpu.PrefetchScalarGridSpec(
                num_scalar_prefetch=1,                 # ids -> SMEM
                grid=(n_blocks,),
                in_specs=[pl.BlockSpec((vocab, d_model), lambda b, ids_ref: (0, 0))],
                out_specs=pl.BlockSpec((tb, d_model), lambda b, ids_ref: (b, 0)),
            ),
            compiler_params=pltpu.CompilerParams(
                dimension_semantics=("parallel",),
                vmem_limit_bytes=vmem_limit),
        )(ids, weight)

    else:  # "hbm"
        out = pl.pallas_call(
            partial(_hbm_gather_kernel, tb=tb, scale=scale, n_blocks=n_blocks),
            out_shape=out_shape,
            grid_spec=pltpu.PrefetchScalarGridSpec(
                num_scalar_prefetch=1,                 # ids -> SMEM
                grid=(n_blocks,),
                in_specs=[pl.BlockSpec(memory_space=pl.ANY)],   # table stays in HBM
                out_specs=pl.BlockSpec((tb, d_model), lambda b, ids_ref: (b, 0)),
                scratch_shapes=[
                    pltpu.VMEM((2, tb, d_model), weight.dtype),  # double-buffered rows
                    pltpu.SemaphoreType.DMA((2,)),               # one sem per slot
                ],
            ),
            # Sequential grid: cross-step prefetch into the double buffer relies on
            # in-order execution of the token-block axis.
            compiler_params=pltpu.CompilerParams(
                dimension_semantics=("arbitrary",),
                vmem_limit_bytes=vmem_limit),
        )(ids, weight)

    if n_pad != n:
        out = out[:n]
    return out.reshape(*orig_shape, d_model)


# ----------------------------------------------------------------------------- demo / check
if __name__ == "__main__":
    B, S = 2, 8
    VOCAB, D_MODEL = 100, 32

    key = jax.random.PRNGKey(0)
    k_ids, k_w = jax.random.split(key)
    x = jax.random.randint(k_ids, (B, S), 0, VOCAB, dtype=jnp.int32)
    weight = jax.random.normal(k_w, (VOCAB, D_MODEL), dtype=jnp.float32)

    ref = weight[x] * math.sqrt(D_MODEL)

    # Default dispatch (small table -> resident one-hot fast path).
    out = jax.block_until_ready(embeddings(x, weight))
    assert out.shape == (B, S, D_MODEL)
    assert out.dtype == weight.dtype
    assert jnp.allclose(out, ref, atol=1e-5, rtol=1e-5)

    # Also exercise the other two code paths on the same inputs.
    for p in ("resident", "hbm"):
        alt = jax.block_until_ready(embeddings(x, weight, force_path=p))
        assert jnp.allclose(alt, ref, atol=1e-5, rtol=1e-5), f"path {p} mismatch"

    print("KERNEL_OK")
</pallas_src>

<mosaic_0001>
module attributes {stable_mosaic.version = 11 : i64} {
  func.func @_onehot_kernel(%arg0: i32, %arg1: memref<16x1xi32, #tpu.memory_space<vmem>>, %arg2: memref<100x32xf32, #tpu.memory_space<vmem>>, %arg3: memref<16x32xf32, #tpu.memory_space<vmem>>) attributes {dimension_semantics = [#tpu.dimension_semantics<parallel>], iteration_bounds = array<i64: 1>, scalar_prefetch = 0 : i64, scratch_operands = 0 : i64, tpu.core_type = #tpu.core_type<tc>, window_params = [{transform_indices = @transform_0, window_bounds = array<i64: 16, 1>}, {pipeline_mode = #tpu.pipeline_mode<synchronous>, transform_indices = @transform_1, window_bounds = array<i64: 100, 32>}, {transform_indices = @transform_2, window_bounds = array<i64: 16, 32>}]} {
    %c0 = arith.constant 0 : index
    %c0_0 = arith.constant 0 : index
    %0 = vector.load %arg1[%c0, %c0_0] : memref<16x1xi32, #tpu.memory_space<vmem>>, vector<16x1xi32>
    %1 = tpu.iota {dimensions = array<i32: 1>} : vector<16x100xi32>
    %2 = vector.broadcast %0 : vector<16x1xi32> to vector<16x100xi32>
    %3 = arith.cmpi eq, %2, %1 : vector<16x100xi32>
    %4 = arith.extui %3 : vector<16x100xi1> to vector<16x100xi32>
    %5 = arith.sitofp %4 : vector<16x100xi32> to vector<16x100xf32>
    %c0_1 = arith.constant 0 : index
    %c0_2 = arith.constant 0 : index
    %6 = vector.load %arg2[%c0_1, %c0_2] : memref<100x32xf32, #tpu.memory_space<vmem>>, vector<100x32xf32>
    %cst = arith.constant dense<0.000000e+00> : vector<16x32xf32>
    %7 = tpu.matmul %5, %6, %cst {dimension_numbers = #tpu.dot_dimension_numbers<[1], [0], [0], [1], [0, 0, 1, 1], [], []>, precision = #tpu.contract_precision<fp32>} : vector<16x100xf32>, vector<100x32xf32>, vector<16x32xf32> -> vector<16x32xf32>
    %cst_3 = arith.constant 5.65685415 : f32
    %8 = vector.broadcast %cst_3 : f32 to vector<16x32xf32>
    %9 = arith.mulf %7, %8 : vector<16x32xf32>
    %c0_4 = arith.constant 0 : index
    %c0_5 = arith.constant 0 : index
    %10 = vector.load %arg3[%c0_4, %c0_5] : memref<16x32xf32, #tpu.memory_space<vmem>>, vector<16x32xf32>
    tpu.vector_store %arg3[%c0_4, %c0_5], %9 {strides = array<i32>} : memref<16x32xf32, #tpu.memory_space<vmem>>, vector<16x32xf32>,
    return
  }
  func.func @transform_0(%arg0: i32) -> (i32, i32) {
    %c0_i32 = arith.constant 0 : i32
    %c0_i32_0 = arith.constant 0 : i32
    return %arg0, %c0_i32 : i32, i32
  }
  func.func @transform_1(%arg0: i32) -> (i32, i32) {
    %c0_i32 = arith.constant 0 : i32
    %c0_i32_0 = arith.constant 0 : i32
    %c0_i32_1 = arith.constant 0 : i32
    return %c0_i32, %c0_i32_0 : i32, i32
  }
  func.func @transform_2(%arg0: i32) -> (i32, i32) {
    %c0_i32 = arith.constant 0 : i32
    %c0_i32_0 = arith.constant 0 : i32
    return %arg0, %c0_i32 : i32, i32
  }
}

</mosaic_0001>

<llo_original>
// kernel: tpu_custom_call.1
$region0: #{tpu_custom_call.1}
  #allocation0 [shape = 'u32[]', space=smem, size = 0x4, offset = 0x4, fixed_abs, tag = 'smem constant byte address 0x4 - core index']
  #allocation1 [shape = 'u32[144,128]{1,0:T(1,128)}', space=vmem, size = 0x12000, scoped, tag = 'internal scratch']
  %s0 = inlined_call_operand.vmem [shape: s32[16,1], index: 0, kind: input, shape index: {}]
  %s1 = inlined_call_operand.vmem [shape: f32[100,32], index: 1, kind: input, shape index: {}]
  %s2 = inlined_call_operand.hbm [shape: f32[16,32], index: 2, kind: output, shape index: {}]
  %s3 = sld [smem:[#allocation0]]
  $region18: #{tpu_custom_call.1} parent=0
    _
  %s5 = ssub.s32 1, %s3
  %s6 = scalar_select 0, %s5, %s3
  $region1: #{tpu_custom_call.1} parent=0
    #allocation2 [shape = 'u8[8192]{0}', space=vmem, size = 0x2000, scoped, tag = 'output window, operand 0, single buffered']
    #allocation3 [shape = 's32[1]{0}', space=sflag, size = 0x4, scoped, tag = 'scoped memory for tpu_custom_call.1']
    %7 = vsyncpa [#allocation3], 0
    // Predicated region
    $region2: #{tpu_custom_call.1} parent=1 // pred_check
      _
    $region3: #{tpu_custom_call.1} parent=1 // pred_check_branch
      %9 = sbr.rel (0) target = $region5
    $region4: #{tpu_custom_call.1} parent=1 // pred_region
      _
    $region5: #{tpu_custom_call.1} parent=1 // pred_fallthru
      _
    // Predicated region
    $region6: #{tpu_custom_call.1} parent=1 // pred_check
      _
    $region7: #{tpu_custom_call.1} parent=1 // pred_check_branch
      %11 = sbr.rel (0) target = $region9
    $region8: #{tpu_custom_call.1} parent=1 // pred_region
      _
    $region9: #{tpu_custom_call.1} parent=1 // pred_fallthru
      _
    %v12 = vld [vmem:[%s0] sm:$0xff]
    %v13 = vld [vmem:[%s0 + $0x8] sm:$0xff]
    %v14 = vlaneseq
    %v15 = vand.u32 %v14, 127
    %16 = vset.pattern.permute.xlu0 0
    %17 = vperm.xlu0 %16, %v12
    %v18 = vpop.permute.xlu0 %17
    %19 = vset.pattern.permute.xlu0 0
    %20 = vperm.xlu0 %19, %v13
    %v21 = vpop.permute.xlu0 %20
    %vm22 = vcmp.eq.s32.totalorder %v18, %v15
    %vm23 = vcmp.eq.s32.totalorder %v21, %v15
    %v24 = vsel %vm22, 1, 0
    %v25 = vsel %vm23, 1, 0
    %v26 = vcvt.s32.f32 %v24
    %v27 = vcvt.s32.f32 %v25
    %v28 = vld [vmem:[%s1] sm:$0xff]
    %v29 = vld [vmem:[%s1 + $0x8] sm:$0xff]
    %v30 = vld [vmem:[%s1 + $0x10] sm:$0xff]
    %v31 = vld [vmem:[%s1 + $0x18] sm:$0xff]
    %v32 = vld [vmem:[%s1 + $0x20] sm:$0xff]
    %v33 = vld [vmem:[%s1 + $0x28] sm:$0xff]
    %v34 = vld [vmem:[%s1 + $0x30] sm:$0xff]
    %v35 = vld [vmem:[%s1 + $0x38] sm:$0xff]
    %v36 = vld [vmem:[%s1 + $0x40] sm:$0xff]
    %v37 = vld [vmem:[%s1 + $0x48] sm:$0xff]
    %v38 = vld [vmem:[%s1 + $0x50] sm:$0xff]
    %v39 = vld [vmem:[%s1 + $0x58] sm:$0xff]
    %v40 = vld [vmem:[%s1 + $0x60] sm:$0xf]
    %vm41 = vcmask 818176
    %v43 = vsel %vm41, %v26, 0
    %v46 = vsel %vm41, %v27, 0
    %vm48 = vcmask 1043456
    %v50 = vsel %vm48, %v40, 0
    %52 = vmatprep.subr.mxu0 0.0
    %v53 = vand.u32 %v28, 4294901760
    %54 = vmatpush1.msra.mxu0 %v53
    %55 = vmatprep.subr.mxu0 0.0
    %v56 = vand.u32 %v29, 4294901760
    %57 = vmatpush1.msra.mxu0 %v56
    %58 = vmatprep.subr.mxu0 0.0
    %v59 = vand.u32 %v30, 4294901760
    %60 = vmatpush1.msra.mxu0 %v59
    %61 = vmatprep.subr.mxu0 0.0
    %v62 = vand.u32 %v31, 4294901760
    %63 = vmatpush1.msra.mxu0 %v62
    %64 = vmatprep.subr.mxu0 0.0
    %v65 = vand.u32 %v32, 4294901760
    %66 = vmatpush1.msra.mxu0 %v65
    %67 = vmatprep.subr.mxu0 0.0
    %v68 = vand.u32 %v33, 4294901760
    %69 = vmatpush1.msra.mxu0 %v68
    %70 = vmatprep.subr.mxu0 0.0
    %v71 = vand.u32 %v34, 4294901760
    %72 = vmatpush1.msra.mxu0 %v71
    %73 = vmatprep.subr.mxu0 0.0
    %v74 = vand.u32 %v35, 4294901760
    %75 = vmatpush1.msra.mxu0 %v74
    %76 = vmatprep.subr.mxu0 0.0
    %v77 = vand.u32 %v36, 4294901760
    %78 = vmatpush1.msra.mxu0 %v77
    %79 = vmatprep.subr.mxu0 0.0
    %v80 = vand.u32 %v37, 4294901760
    %81 = vmatpush1.msra.mxu0 %v80
    %82 = vmatprep.subr.mxu0 0.0
    %v83 = vand.u32 %v38, 4294901760
    %84 = vmatpush1.msra.mxu0 %v83
    %85 = vmatprep.subr.mxu0 0.0
    %v86 = vand.u32 %v39, 4294901760
    %87 = vmatpush1.msra.mxu0 %v86
    %88 = vmatprep.subr.mxu0 0.0
    %v89 = vand.u32 %v50, 4294901760
    %90 = vmatpush1.msra.mxu0 %v89
    %91 = vmatprep.subr.mxu0 0.0
    %92 = vmatpush1.msra.mxu0 0.0
    %93 = vmatprep.subr.mxu0 0.0
    %94 = vmatpush1.msra.mxu0 0.0
    %95 = vmatprep.subr.mxu0 0.0
    %96 = vmatpush1.msra.mxu0 0.0
    %97 = vmatprep.subr.mxu0 0.0
    %98 = vmatpush1.msra.mxu0 0.0
    %99 = vmatprep.subr.mxu0 0.0
    %100 = vmatpush1.msra.mxu0 0.0
    %101 = vmatprep.subr.mxu0 0.0
    %102 = vmatpush1.msra.mxu0 0.0
    %103 = vmatprep.subr.mxu0 0.0
    %104 = vmatpush1.msra.mxu0 0.0
    %105 = vmatprep.subr.mxu0 0.0
    %106 = vmatpush1.msra.mxu0 0.0
    %107 = vmatprep.subr.mxu0 0.0
    %108 = vmatpush1.msra.mxu0 0.0
    %109 = vmatprep.subr.mxu0 0.0
    %110 = vmatpush1.msra.mxu0 0.0
    %111 = vmatprep.subr.mxu0 0.0
    %112 = vmatpush1.msra.mxu0 0.0
    %113 = vmatprep.subr.mxu0 0.0
    %114 = vmatpush1.msra.mxu0 0.0
    %115 = vmatprep.subr.mxu0 0.0
    %116 = vmatpush1.msra.mxu0 0.0
    %117 = vmatprep.subr.mxu0 0.0
    %118 = vmatpush1.msra.mxu0 0.0
    %119 = vmatprep.subr.mxu0 0.0
    %120 = vmatpush1.msra.mxu0 0.0
    %121 = vmatprep.subr.mxu0 0.0
    %122 = vmatpush1.msra.mxu0 0.0
    %123 = vmatprep.subr.mxu0 0.0
    %124 = vmatpush1.msra.mxu0 0.0
    %125 = vmatprep.subr.mxu0 0.0
    %126 = vmatpush1.msra.mxu0 0.0
    %127 = vmatprep.subr.mxu0 0.0
    %128 = vmatpush1.msra.mxu0 0.0
    %129 = vmatprep.mubr.f32.mxu0 0.0
    %v130 = vand.u32 %v43, 4294901760
    %v131 = vsub.f32 %v43, %v130
    %v132 = vand.u32 %v131, 4294901760
    %v133 = vsub.f32 %v131, %v132
    %v134 = vand.u32 %v133, 4294901760
    %135 = vmatmul.mubr.f32.gmra.mrb[0].mxu0 %v134
    %v136 = vpop.f32.mrb[0].mxu0
    %v137 = vadd.f32 0.0, %v136
    %v138 = vpop.f32.mrb[0].mxu0
    %139 = vmatprep.mubr.f32.mxu0 0.0
    %v140 = vand.u32 %v46, 4294901760
    %v141 = vsub.f32 %v46, %v140
    %v142 = vand.u32 %v141, 4294901760
    %v143 = vsub.f32 %v141, %v142
    %v144 = vand.u32 %v143, 4294901760
    %145 = vmatmul.mubr.f32.gmra.mrb[0].mxu0 %v144
    %v146 = vpop.f32.mrb[0].mxu0
    %v147 = vadd.f32 0.0, %v146
    %v148 = vpop.f32.mrb[0].mxu0
    %149 = vdwg.mxu0
    %150 = vmatprep.subr.mxu0 0.0
    %v151 = vand.u32 %v28, 4294901760
    %v152 = vsub.f32 %v28, %v151
    %v153 = vand.u32 %v152, 4294901760
    %v154 = vsub.f32 %v152, %v153
    %v155 = vand.u32 %v154, 4294901760
    %156 = vmatpush1.msra.mxu0 %v155
    %157 = vmatprep.subr.mxu0 0.0
    %v158 = vand.u32 %v29, 4294901760
    %v159 = vsub.f32 %v29, %v158
    %v160 = vand.u32 %v159, 4294901760
    %v161 = vsub.f32 %v159, %v160
    %v162 = vand.u32 %v161, 4294901760
    %163 = vmatpush1.msra.mxu0 %v162
    %164 = vmatprep.subr.mxu0 0.0
    %v165 = vand.u32 %v30, 4294901760
    %v166 = vsub.f32 %v30, %v165
    %v167 = vand.u32 %v166, 4294901760
    %v168 = vsub.f32 %v166, %v167
    %v169 = vand.u32 %v168, 4294901760
    %170 = vmatpush1.msra.mxu0 %v169
    %171 = vmatprep.subr.mxu0 0.0
    %v172 = vand.u32 %v31, 4294901760
    %v173 = vsub.f32 %v31, %v172
    %v174 = vand.u32 %v173, 4294901760
    %v175 = vsub.f32 %v173, %v174
    %v176 = vand.u32 %v175, 4294901760
    %177 = vmatpush1.msra.mxu0 %v176
    %178 = vmatprep.subr.mxu0 0.0
    %v179 = vand.u32 %v32, 4294901760
    %v180 = vsub.f32 %v32, %v179
    %v181 = vand.u32 %v180, 4294901760
    %v182 = vsub.f32 %v180, %v181
    %v183 = vand.u32 %v182, 4294901760
    %184 = vmatpush1.msra.mxu0 %v183
    %185 = vmatprep.subr.mxu0 0.0
    %v186 = vand.u32 %v33, 4294901760
    %v187 = vsub.f32 %v33, %v186
    %v188 = vand.u32 %v187, 4294901760
    %v189 = vsub.f32 %v187, %v188
    %v190 = vand.u32 %v189, 4294901760
    %191 = vmatpush1.msra.mxu0 %v190
    %192 = vmatprep.subr.mxu0 0.0
    %v193 = vand.u32 %v34, 4294901760
    %v194 = vsub.f32 %v34, %v193
    %v195 = vand.u32 %v194, 4294901760
    %v196 = vsub.f32 %v194, %v195
    %v197 = vand.u32 %v196, 4294901760
    %198 = vmatpush1.msra.mxu0 %v197
    %199 = vmatprep.subr.mxu0 0.0
    %v200 = vand.u32 %v35, 4294901760
    %v201 = vsub.f32 %v35, %v200
    %v202 = vand.u32 %v201, 4294901760
    %v203 = vsub.f32 %v201, %v202
    %v204 = vand.u32 %v203, 4294901760
    %205 = vmatpush1.msra.mxu0 %v204
    %206 = vmatprep.subr.mxu0 0.0
    %v207 = vand.u32 %v36, 4294901760
    %v208 = vsub.f32 %v36, %v207
    %v209 = vand.u32 %v208, 4294901760
    %v210 = vsub.f32 %v208, %v209
    %v211 = vand.u32 %v210, 4294901760
    %212 = vmatpush1.msra.mxu0 %v211
    %213 = vmatprep.subr.mxu0 0.0
    %v214 = vand.u32 %v37, 4294901760
    %v215 = vsub.f32 %v37, %v214
    %v216 = vand.u32 %v215, 4294901760
    %v217 = vsub.f32 %v215, %v216
    %v218 = vand.u32 %v217, 4294901760
    %219 = vmatpush1.msra.mxu0 %v218
    %220 = vmatprep.subr.mxu0 0.0
    %v221 = vand.u32 %v38, 4294901760
    %v222 = vsub.f32 %v38, %v221
    %v223 = vand.u32 %v222, 4294901760
    %v224 = vsub.f32 %v222, %v223
    %v225 = vand.u32 %v224, 4294901760
    %226 = vmatpush1.msra.mxu0 %v225
    %227 = vmatprep.subr.mxu0 0.0
    %v228 = vand.u32 %v39, 4294901760
    %v229 = vsub.f32 %v39, %v228
    %v230 = vand.u32 %v229, 4294901760
    %v231 = vsub.f32 %v229, %v230
    %v232 = vand.u32 %v231, 4294901760
    %233 = vmatpush1.msra.mxu0 %v232
    %234 = vmatprep.subr.mxu0 0.0
    %v235 = vand.u32 %v50, 4294901760
    %v236 = vsub.f32 %v50, %v235
    %v237 = vand.u32 %v236, 4294901760
    %v238 = vsub.f32 %v236, %v237
    %v239 = vand.u32 %v238, 4294901760
    %240 = vmatpush1.msra.mxu0 %v239
    %241 = vmatprep.subr.mxu0 0.0
    %242 = vmatpush1.msra.mxu0 0.0
    %243 = vmatprep.subr.mxu0 0.0
    %244 = vmatpush1.msra.mxu0 0.0
    %245 = vmatprep.subr.mxu0 0.0
    %246 = vmatpush1.msra.mxu0 0.0
    %247 = vmatprep.subr.mxu0 0.0
    %248 = vmatpush1.msra.mxu0 0.0
    %249 = vmatprep.subr.mxu0 0.0
    %250 = vmatpush1.msra.mxu0 0.0
    %251 = vmatprep.subr.mxu0 0.0
    %252 = vmatpush1.msra.mxu0 0.0
    %253 = vmatprep.subr.mxu0 0.0
    %254 = vmatpush1.msra.mxu0 0.0
    %255 = vmatprep.subr.mxu0 0.0
    %256 = vmatpush1.msra.mxu0 0.0
    %257 = vmatprep.subr.mxu0 0.0
    %258 = vmatpush1.msra.mxu0 0.0
    %259 = vmatprep.subr.mxu0 0.0
    %260 = vmatpush1.msra.mxu0 0.0
    %261 = vmatprep.subr.mxu0 0.0
    %262 = vmatpush1.msra.mxu0 0.0
    %263 = vmatprep.subr.mxu0 0.0
    %264 = vmatpush1.msra.mxu0 0.0
    %265 = vmatprep.subr.mxu0 0.0
    %266 = vmatpush1.msra.mxu0 0.0
    %267 = vmatprep.subr.mxu0 0.0
    %268 = vmatpush1.msra.mxu0 0.0
    %269 = vmatprep.subr.mxu0 0.0
    %270 = vmatpush1.msra.mxu0 0.0
    %271 = vmatprep.subr.mxu0 0.0
    %272 = vmatpush1.msra.mxu0 0.0
    %273 = vmatprep.subr.mxu0 0.0
    %274 = vmatpush1.msra.mxu0 0.0
    %275 = vmatprep.subr.mxu0 0.0
    %276 = vmatpush1.msra.mxu0 0.0
    %277 = vmatprep.subr.mxu0 0.0
    %278 = vmatpush1.msra.mxu0 0.0
    %279 = vmatprep.mubr.f32.mxu0 0.0
    %v280 = vand.u32 %v43, 4294901760
    %281 = vmatmul.mubr.f32.gmra.mrb[0].mxu0 %v280
    %v282 = vpop.f32.mrb[0].mxu0
    %v283 = vadd.f32 %v137, %v282
    %v284 = vpop.f32.mrb[0].mxu0
    %285 = vmatprep.mubr.f32.mxu0 0.0
    %v286 = vand.u32 %v46, 4294901760
    %287 = vmatmul.mubr.f32.gmra.mrb[0].mxu0 %v286
    %v288 = vpop.f32.mrb[0].mxu0
    %v289 = vadd.f32 %v147, %v288
    %v290 = vpop.f32.mrb[0].mxu0
    %291 = vdwg.mxu0
    %292 = vmatprep.subr.mxu0 0.0
    %v293 = vand.u32 %v28, 4294901760
    %v294 = vsub.f32 %v28, %v293
    %295 = vmatpush1.msra.mxu0 %v294
    %296 = vmatprep.subr.mxu0 0.0
    %v297 = vand.u32 %v29, 4294901760
    %v298 = vsub.f32 %v29, %v297
    %299 = vmatpush1.msra.mxu0 %v298
    %300 = vmatprep.subr.mxu0 0.0
    %v301 = vand.u32 %v30, 4294901760
    %v302 = vsub.f32 %v30, %v301
    %303 = vmatpush1.msra.mxu0 %v302
    %304 = vmatprep.subr.mxu0 0.0
    %v305 = vand.u32 %v31, 4294901760
    %v306 = vsub.f32 %v31, %v305
    %307 = vmatpush1.msra.mxu0 %v306
    %308 = vmatprep.subr.mxu0 0.0
    %v309 = vand.u32 %v32, 4294901760
    %v310 = vsub.f32 %v32, %v309
    %311 = vmatpush1.msra.mxu0 %v310
    %312 = vmatprep.subr.mxu0 0.0
    %v313 = vand.u32 %v33, 4294901760
    %v314 = vsub.f32 %v33, %v313
    %315 = vmatpush1.msra.mxu0 %v314
    %316 = vmatprep.subr.mxu0 0.0
    %v317 = vand.u32 %v34, 4294901760
    %v318 = vsub.f32 %v34, %v317
    %319 = vmatpush1.msra.mxu0 %v318
    %320 = vmatprep.subr.mxu0 0.0
    %v321 = vand.u32 %v35, 4294901760
    %v322 = vsub.f32 %v35, %v321
    %323 = vmatpush1.msra.mxu0 %v322
    %324 = vmatprep.subr.mxu0 0.0
    %v325 = vand.u32 %v36, 4294901760
    %v326 = vsub.f32 %v36, %v325
    %327 = vmatpush1.msra.mxu0 %v326
    %328 = vmatprep.subr.mxu0 0.0
    %v329 = vand.u32 %v37, 4294901760
    %v330 = vsub.f32 %v37, %v329
    %331 = vmatpush1.msra.mxu0 %v330
    %332 = vmatprep.subr.mxu0 0.0
    %v333 = vand.u32 %v38, 4294901760
    %v334 = vsub.f32 %v38, %v333
    %335 = vmatpush1.msra.mxu0 %v334
    %336 = vmatprep.subr.mxu0 0.0
    %v337 = vand.u32 %v39, 4294901760
    %v338 = vsub.f32 %v39, %v337
    %339 = vmatpush1.msra.mxu0 %v338
    %340 = vmatprep.subr.mxu0 0.0
    %v341 = vand.u32 %v50, 4294901760
    %v342 = vsub.f32 %v50, %v341
    %343 = vmatpush1.msra.mxu0 %v342
    %344 = vmatprep.subr.mxu0 0.0
    %345 = vmatpush1.msra.mxu0 0.0
    %346 = vmatprep.subr.mxu0 0.0
    %347 = vmatpush1.msra.mxu0 0.0
    %348 = vmatprep.subr.mxu0 0.0
    %349 = vmatpush1.msra.mxu0 0.0
    %350 = vmatprep.subr.mxu0 0.0
    %351 = vmatpush1.msra.mxu0 0.0
    %352 = vmatprep.subr.mxu0 0.0
    %353 = vmatpush1.msra.mxu0 0.0
    %354 = vmatprep.subr.mxu0 0.0
    %355 = vmatpush1.msra.mxu0 0.0
    %356 = vmatprep.subr.mxu0 0.0
    %357 = vmatpush1.msra.mxu0 0.0
    %358 = vmatprep.subr.mxu0 0.0
    %359 = vmatpush1.msra.mxu0 0.0
    %360 = vmatprep.subr.mxu0 0.0
    %361 = vmatpush1.msra.mxu0 0.0
    %362 = vmatprep.subr.mxu0 0.0
    %363 = vmatpush1.msra.mxu0 0.0
    %364 = vmatprep.subr.mxu0 0.0
    %365 = vmatpush1.msra.mxu0 0.0
    %366 = vmatprep.subr.mxu0 0.0
    %367 = vmatpush1.msra.mxu0 0.0
    %368 = vmatprep.subr.mxu0 0.0
    %369 = vmatpush1.msra.mxu0 0.0
    %370 = vmatprep.subr.mxu0 0.0
    %371 = vmatpush1.msra.mxu0 0.0
    %372 = vmatprep.subr.mxu0 0.0
    %373 = vmatpush1.msra.mxu0 0.0
    %374 = vmatprep.subr.mxu0 0.0
    %375 = vmatpush1.msra.mxu0 0.0
    %376 = vmatprep.subr.mxu0 0.0
    %377 = vmatpush1.msra.mxu0 0.0
    %378 = vmatprep.subr.mxu0 0.0
    %379 = vmatpush1.msra.mxu0 0.0
    %380 = vmatprep.subr.mxu0 0.0
    %381 = vmatpush1.msra.mxu0 0.0
    %382 = vmatprep.mubr.f32.mxu0 0.0
    %v383 = vand.u32 %v43, 4294901760
    %v384 = vsub.f32 %v43, %v383
    %385 = vmatmul.mubr.f32.gmra.mrb[0].mxu0 %v384
    %v386 = vpop.f32.mrb[0].mxu0
    %v387 = vadd.f32 %v283, %v386
    %v388 = vpop.f32.mrb[0].mxu0
    %389 = vmatprep.mubr.f32.mxu0 0.0
    %v390 = vand.u32 %v46, 4294901760
    %v391 = vsub.f32 %v46, %v390
    %392 = vmatmul.mubr.f32.gmra.mrb[0].mxu0 %v391
    %v393 = vpop.f32.mrb[0].mxu0
    %v394 = vadd.f32 %v289, %v393
    %v395 = vpop.f32.mrb[0].mxu0
    %396 = vdwg.mxu0
    %397 = vmatprep.subr.mxu0 0.0
    %v398 = vand.u32 %v28, 4294901760
    %399 = vmatpush1.msra.mxu0 %v398
    %400 = vmatprep.subr.mxu0 0.0
    %v401 = vand.u32 %v29, 4294901760
    %402 = vmatpush1.msra.mxu0 %v401
    %403 = vmatprep.subr.mxu0 0.0
    %v404 = vand.u32 %v30, 4294901760
    %405 = vmatpush1.msra.mxu0 %v404
    %406 = vmatprep.subr.mxu0 0.0
    %v407 = vand.u32 %v31, 4294901760
    %408 = vmatpush1.msra.mxu0 %v407
    %409 = vmatprep.subr.mxu0 0.0
    %v410 = vand.u32 %v32, 4294901760
    %411 = vmatpush1.msra.mxu0 %v410
    %412 = vmatprep.subr.mxu0 0.0
    %v413 = vand.u32 %v33, 4294901760
    %414 = vmatpush1.msra.mxu0 %v413
    %415 = vmatprep.subr.mxu0 0.0
    %v416 = vand.u32 %v34, 4294901760
    %417 = vmatpush1.msra.mxu0 %v416
    %418 = vmatprep.subr.mxu0 0.0
    %v419 = vand.u32 %v35, 4294901760
    %420 = vmatpush1.msra.mxu0 %v419
    %421 = vmatprep.subr.mxu0 0.0
    %v422 = vand.u32 %v36, 4294901760
    %423 = vmatpush1.msra.mxu0 %v422
    %424 = vmatprep.subr.mxu0 0.0
    %v425 = vand.u32 %v37, 4294901760
    %426 = vmatpush1.msra.mxu0 %v425
    %427 = vmatprep.subr.mxu0 0.0
    %v428 = vand.u32 %v38, 4294901760
    %429 = vmatpush1.msra.mxu0 %v428
    %430 = vmatprep.subr.mxu0 0.0
    %v431 = vand.u32 %v39, 4294901760
    %432 = vmatpush1.msra.mxu0 %v431
    %433 = vmatprep.subr.mxu0 0.0
    %v434 = vand.u32 %v50, 4294901760
    %435 = vmatpush1.msra.mxu0 %v434
    %436 = vmatprep.subr.mxu0 0.0
    %437 = vmatpush1.msra.mxu0 0.0
    %438 = vmatprep.subr.mxu0 0.0
    %439 = vmatpush1.msra.mxu0 0.0
    %440 = vmatprep.subr.mxu0 0.0
    %441 = vmatpush1.msra.mxu0 0.0
    %442 = vmatprep.subr.mxu0 0.0
    %443 = vmatpush1.msra.mxu0 0.0
    %444 = vmatprep.subr.mxu0 0.0
    %445 = vmatpush1.msra.mxu0 0.0
    %446 = vmatprep.subr.mxu0 0.0
    %447 = vmatpush1.msra.mxu0 0.0
    %448 = vmatprep.subr.mxu0 0.0
    %449 = vmatpush1.msra.mxu0 0.0
    %450 = vmatprep.subr.mxu0 0.0
    %451 = vmatpush1.msra.mxu0 0.0
    %452 = vmatprep.subr.mxu0 0.0
    %453 = vmatpush1.msra.mxu0 0.0
    %454 = vmatprep.subr.mxu0 0.0
    %455 = vmatpush1.msra.mxu0 0.0
    %456 = vmatprep.subr.mxu0 0.0
    %457 = vmatpush1.msra.mxu0 0.0
    %458 = vmatprep.subr.mxu0 0.0
    %459 = vmatpush1.msra.mxu0 0.0
    %460 = vmatprep.subr.mxu0 0.0
    %461 = vmatpush1.msra.mxu0 0.0
    %462 = vmatprep.subr.mxu0 0.0
    %463 = vmatpush1.msra.mxu0 0.0
    %464 = vmatprep.subr.mxu0 0.0
    %465 = vmatpush1.msra.mxu0 0.0
    %466 = vmatprep.subr.mxu0 0.0
    %467 = vmatpush1.msra.mxu0 0.0
    %468 = vmatprep.subr.mxu0 0.0
    %469 = vmatpush1.msra.mxu0 0.0
    %470 = vmatprep.subr.mxu0 0.0
    %471 = vmatpush1.msra.mxu0 0.0
    %472 = vmatprep.subr.mxu0 0.0
    %473 = vmatpush1.msra.mxu0 0.0
    %474 = vmatprep.mubr.f32.mxu0 0.0
    %v475 = vand.u32 %v43, 4294901760
    %v476 = vsub.f32 %v43, %v475
    %v477 = vand.u32 %v476, 4294901760
    %478 = vmatmul.mubr.f32.gmra.mrb[0].mxu0 %v477
    %v479 = vpop.f32.mrb[0].mxu0
    %v480 = vadd.f32 %v387, %v479
    %v481 = vpop.f32.mrb[0].mxu0
    %482 = vmatprep.mubr.f32.mxu0 0.0
    %v483 = vand.u32 %v46, 4294901760
    %v484 = vsub.f32 %v46, %v483
    %v485 = vand.u32 %v484, 4294901760
    %486 = vmatmul.mubr.f32.gmra.mrb[0].mxu0 %v485
    %v487 = vpop.f32.mrb[0].mxu0
    %v488 = vadd.f32 %v394, %v487
    %v489 = vpop.f32.mrb[0].mxu0
    %490 = vdwg.mxu0
    %491 = vmatprep.subr.mxu0 0.0
    %v492 = vand.u32 %v28, 4294901760
    %v493 = vsub.f32 %v28, %v492
    %v494 = vand.u32 %v493, 4294901760
    %495 = vmatpush1.msra.mxu0 %v494
    %496 = vmatprep.subr.mxu0 0.0
    %v497 = vand.u32 %v29, 4294901760
    %v498 = vsub.f32 %v29, %v497
    %v499 = vand.u32 %v498, 4294901760
    %500 = vmatpush1.msra.mxu0 %v499
    %501 = vmatprep.subr.mxu0 0.0
    %v502 = vand.u32 %v30, 4294901760
    %v503 = vsub.f32 %v30, %v502
    %v504 = vand.u32 %v503, 4294901760
    %505 = vmatpush1.msra.mxu0 %v504
    %506 = vmatprep.subr.mxu0 0.0
    %v507 = vand.u32 %v31, 4294901760
    %v508 = vsub.f32 %v31, %v507
    %v509 = vand.u32 %v508, 4294901760
    %510 = vmatpush1.msra.mxu0 %v509
    %511 = vmatprep.subr.mxu0 0.0
    %v512 = vand.u32 %v32, 4294901760
    %v513 = vsub.f32 %v32, %v512
    %v514 = vand.u32 %v513, 4294901760
    %515 = vmatpush1.msra.mxu0 %v514
    %516 = vmatprep.subr.mxu0 0.0
    %v517 = vand.u32 %v33, 4294901760
    %v518 = vsub.f32 %v33, %v517
    %v519 = vand.u32 %v518, 4294901760
    %520 = vmatpush1.msra.mxu0 %v519
    %521 = vmatprep.subr.mxu0 0.0
    %v522 = vand.u32 %v34, 4294901760
    %v523 = vsub.f32 %v34, %v522
    %v524 = vand.u32 %v523, 4294901760
    %525 = vmatpush1.msra.mxu0 %v524
    %526 = vmatprep.subr.mxu0 0.0
    %v527 = vand.u32 %v35, 4294901760
    %v528 = vsub.f32 %v35, %v527
    %v529 = vand.u32 %v528, 4294901760
    %530 = vmatpush1.msra.mxu0 %v529
    %531 = vmatprep.subr.mxu0 0.0
    %v532 = vand.u32 %v36, 4294901760
    %v533 = vsub.f32 %v36, %v532
    %v534 = vand.u32 %v533, 4294901760
    %535 = vmatpush1.msra.mxu0 %v534
    %536 = vmatprep.subr.mxu0 0.0
    %v537 = vand.u32 %v37, 4294901760
    %v538 = vsub.f32 %v37, %v537
    %v539 = vand.u32 %v538, 4294901760
    %540 = vmatpush1.msra.mxu0 %v539
    %541 = vmatprep.subr.mxu0 0.0
    %v542 = vand.u32 %v38, 4294901760
    %v543 = vsub.f32 %v38, %v542
    %v544 = vand.u32 %v543, 4294901760
    %545 = vmatpush1.msra.mxu0 %v544
    %546 = vmatprep.subr.mxu0 0.0
    %v547 = vand.u32 %v39, 4294901760
    %v548 = vsub.f32 %v39, %v547
    %v549 = vand.u32 %v548, 4294901760
    %550 = vmatpush1.msra.mxu0 %v549
    %551 = vmatprep.subr.mxu0 0.0
    %v552 = vand.u32 %v50, 4294901760
    %v553 = vsub.f32 %v50, %v552
    %v554 = vand.u32 %v553, 4294901760
    %555 = vmatpush1.msra.mxu0 %v554
    %556 = vmatprep.subr.mxu0 0.0
    %557 = vmatpush1.msra.mxu0 0.0
    %558 = vmatprep.subr.mxu0 0.0
    %559 = vmatpush1.msra.mxu0 0.0
    %560 = vmatprep.subr.mxu0 0.0
    %561 = vmatpush1.msra.mxu0 0.0
    %562 = vmatprep.subr.mxu0 0.0
    %563 = vmatpush1.msra.mxu0 0.0
    %564 = vmatprep.subr.mxu0 0.0
    %565 = vmatpush1.msra.mxu0 0.0
    %566 = vmatprep.subr.mxu0 0.0
    %567 = vmatpush1.msra.mxu0 0.0
    %568 = vmatprep.subr.mxu0 0.0
    %569 = vmatpush1.msra.mxu0 0.0
    %570 = vmatprep.subr.mxu0 0.0
    %571 = vmatpush1.msra.mxu0 0.0
    %572 = vmatprep.subr.mxu0 0.0
    %573 = vmatpush1.msra.mxu0 0.0
    %574 = vmatprep.subr.mxu0 0.0
    %575 = vmatpush1.msra.mxu0 0.0
    %576 = vmatprep.subr.mxu0 0.0
    %577 = vmatpush1.msra.mxu0 0.0
    %578 = vmatprep.subr.mxu0 0.0
    %579 = vmatpush1.msra.mxu0 0.0
    %580 = vmatprep.subr.mxu0 0.0
    %581 = vmatpush1.msra.mxu0 0.0
    %582 = vmatprep.subr.mxu0 0.0
    %583 = vmatpush1.msra.mxu0 0.0
    %584 = vmatprep.subr.mxu0 0.0
    %585 = vmatpush1.msra.mxu0 0.0
    %586 = vmatprep.subr.mxu0 0.0
    %587 = vmatpush1.msra.mxu0 0.0
    %588 = vmatprep.subr.mxu0 0.0
    %589 = vmatpush1.msra.mxu0 0.0
    %590 = vmatprep.subr.mxu0 0.0
    %591 = vmatpush1.msra.mxu0 0.0
    %592 = vmatprep.subr.mxu0 0.0
    %593 = vmatpush1.msra.mxu0 0.0
    %594 = vmatprep.mubr.f32.mxu0 0.0
    %v595 = vand.u32 %v43, 4294901760
    %596 = vmatmul.mubr.f32.gmra.mrb[0].mxu0 %v595
    %v597 = vpop.f32.mrb[0].mxu0
    %v598 = vadd.f32 %v480, %v597
    %v599 = vpop.f32.mrb[0].mxu0
    %600 = vmatprep.mubr.f32.mxu0 0.0
    %v601 = vand.u32 %v46, 4294901760
    %602 = vmatmul.mubr.f32.gmra.mrb[0].mxu0 %v601
    %v603 = vpop.f32.mrb[0].mxu0
    %v604 = vadd.f32 %v488, %v603
    %v605 = vpop.f32.mrb[0].mxu0
    %606 = vdwg.mxu0
    %607 = vmatprep.subr.mxu0 0.0
    %v608 = vand.u32 %v28, 4294901760
    %609 = vmatpush1.msra.mxu0 %v608
    %610 = vmatprep.subr.mxu0 0.0
    %v611 = vand.u32 %v29, 4294901760
    %612 = vmatpush1.msra.mxu0 %v611
    %613 = vmatprep.subr.mxu0 0.0
    %v614 = vand.u32 %v30, 4294901760
    %615 = vmatpush1.msra.mxu0 %v614
    %616 = vmatprep.subr.mxu0 0.0
    %v617 = vand.u32 %v31, 4294901760
    %618 = vmatpush1.msra.mxu0 %v617
    %619 = vmatprep.subr.mxu0 0.0
    %v620 = vand.u32 %v32, 4294901760
    %621 = vmatpush1.msra.mxu0 %v620
    %622 = vmatprep.subr.mxu0 0.0
    %v623 = vand.u32 %v33, 4294901760
    %624 = vmatpush1.msra.mxu0 %v623
    %625 = vmatprep.subr.mxu0 0.0
    %v626 = vand.u32 %v34, 4294901760
    %627 = vmatpush1.msra.mxu0 %v626
    %628 = vmatprep.subr.mxu0 0.0
    %v629 = vand.u32 %v35, 4294901760
    %630 = vmatpush1.msra.mxu0 %v629
    %631 = vmatprep.subr.mxu0 0.0
    %v632 = vand.u32 %v36, 4294901760
    %633 = vmatpush1.msra.mxu0 %v632
    %634 = vmatprep.subr.mxu0 0.0
    %v635 = vand.u32 %v37, 4294901760
    %636 = vmatpush1.msra.mxu0 %v635
    %637 = vmatprep.subr.mxu0 0.0
    %v638 = vand.u32 %v38, 4294901760
    %639 = vmatpush1.msra.mxu0 %v638
    %640 = vmatprep.subr.mxu0 0.0
    %v641 = vand.u32 %v39, 4294901760
    %642 = vmatpush1.msra.mxu0 %v641
    %643 = vmatprep.subr.mxu0 0.0
    %v644 = vand.u32 %v50, 4294901760
    %645 = vmatpush1.msra.mxu0 %v644
    %646 = vmatprep.subr.mxu0 0.0
    %647 = vmatpush1.msra.mxu0 0.0
    %648 = vmatprep.subr.mxu0 0.0
    %649 = vmatpush1.msra.mxu0 0.0
    %650 = vmatprep.subr.mxu0 0.0
    %651 = vmatpush1.msra.mxu0 0.0
    %652 = vmatprep.subr.mxu0 0.0
    %653 = vmatpush1.msra.mxu0 0.0
    %654 = vmatprep.subr.mxu0 0.0
    %655 = vmatpush1.msra.mxu0 0.0
    %656 = vmatprep.subr.mxu0 0.0
    %657 = vmatpush1.msra.mxu0 0.0
    %658 = vmatprep.subr.mxu0 0.0
    %659 = vmatpush1.msra.mxu0 0.0
    %660 = vmatprep.subr.mxu0 0.0
    %661 = vmatpush1.msra.mxu0 0.0
    %662 = vmatprep.subr.mxu0 0.0
    %663 = vmatpush1.msra.mxu0 0.0
    %664 = vmatprep.subr.mxu0 0.0
    %665 = vmatpush1.msra.mxu0 0.0
    %666 = vmatprep.subr.mxu0 0.0
    %667 = vmatpush1.msra.mxu0 0.0
    %668 = vmatprep.subr.mxu0 0.0
    %669 = vmatpush1.msra.mxu0 0.0
    %670 = vmatprep.subr.mxu0 0.0
    %671 = vmatpush1.msra.mxu0 0.0
    %672 = vmatprep.subr.mxu0 0.0
    %673 = vmatpush1.msra.mxu0 0.0
    %674 = vmatprep.subr.mxu0 0.0
    %675 = vmatpush1.msra.mxu0 0.0
    %676 = vmatprep.subr.mxu0 0.0
    %677 = vmatpush1.msra.mxu0 0.0
    %678 = vmatprep.subr.mxu0 0.0
    %679 = vmatpush1.msra.mxu0 0.0
    %680 = vmatprep.subr.mxu0 0.0
    %681 = vmatpush1.msra.mxu0 0.0
    %682 = vmatprep.subr.mxu0 0.0
    %683 = vmatpush1.msra.mxu0 0.0
    %684 = vmatprep.mubr.f32.mxu0 0.0
    %v685 = vand.u32 %v43, 4294901760
    %686 = vmatmul.mubr.f32.gmra.mrb[0].mxu0 %v685
    %v687 = vpop.f32.mrb[0].mxu0
    %v688 = vadd.f32 %v598, %v687
    %v689 = vpop.f32.mrb[0].mxu0
    %690 = vmatprep.mubr.f32.mxu0 0.0
    %v691 = vand.u32 %v46, 4294901760
    %692 = vmatmul.mubr.f32.gmra.mrb[0].mxu0 %v691
    %v693 = vpop.f32.mrb[0].mxu0
    %v694 = vadd.f32 %v604, %v693
    %v695 = vpop.f32.mrb[0].mxu0
    %696 = vdwg.mxu0
    %v697 = vmul.f32 %v688, 5.656854
    %v698 = vmul.f32 %v694, 5.656854
    %vm699 = vcmask 261120
    %700 = vst.msk [vmem:[#allocation2] sm:$0xff] %vm699, %v697
    %701 = vst.msk [vmem:[#allocation2 + $0x8] sm:$0xff] %vm699, %v698
    // Predicated region
    $region10: #{tpu_custom_call.1} parent=1 // pred_check
      _
    $region11: #{tpu_custom_call.1} parent=1 // pred_check_branch
      %703 = sbr.rel (0) target = $region13
    $region12: #{tpu_custom_call.1} parent=1 // pred_region
      %s705 = ssub.s32 256, 256
      %706 = vsyncadd [#allocation3], %s705
      %s707 = sshll.u32 [#allocation2], 4
      %s708 = int_to_ptr.vmem [resolvable:$true] %s707
      %713 = dma.vmem_to_hbm [thread:$0]  %s708, 256, %s2, [#allocation3], 128, 128, 8
    $region13: #{tpu_custom_call.1} parent=1 // pred_fallthru
      _
    // Predicated region
    $region14: #{tpu_custom_call.1} parent=1 // pred_check
      _
    $region15: #{tpu_custom_call.1} parent=1 // pred_check_branch
      %715 = sbr.rel (0) target = $region17
    $region16: #{tpu_custom_call.1} parent=1 // pred_region
      %716 = dma.done [#allocation3], 256
    $region17: #{tpu_custom_call.1} parent=1 // pred_fallthru
      _
    %717 = vsyncpa [#allocation3], 1

</llo_original>
